<compile_context>
chip_gen: v7x
topology: tpu7x:2x2x1
jax: 0.10.0
libtpu: 0.0.40
codegen_flags: <defaults>
</compile_context>

<pallas_src>
import functools

import jax
import jax.numpy as jnp
from jax.experimental import pallas as pl
from jax.experimental.pallas import tpu as pltpu


# ----------------------------- model dims (small, deterministic) -------------
Z_DIM = 8          # z_dim
COND_DIM = 16      # cond_dim
H_DIM = 32         # h_dim
INPUT_DIM = 64     # input_dim  (decoder output width)
P_DIM = 10         # p_dim      (unused in forward, kept for signature parity)

D_IN = Z_DIM + COND_DIM   # decoder consumes [z | cond] along dim=1
LANES = 128               # pad every feature dim to full lane width

BATCH = 16


def _relu(x):
    return jnp.maximum(x, 0.0)


def _decoder_kernel(
    z_ref, cond_ref,
    # cond_encoder1 params (N-padded to 128 lanes)
    w1_ref, b1_ref, w2_ref, b2_ref, w3_ref, b3_ref,
    # main params (w4 pre-split into z / cond halves, N-padded to 128 lanes)
    w4z_ref, w4c_ref, b4_ref, w5_ref, b5_ref, w6_ref, b6_ref, w7_ref, b7_ref,
    out_ref,
):
    f32 = jnp.float32
    z = z_ref[...]        # (TM, Z_DIM)
    cond = cond_ref[...]  # (TM, COND_DIM)

    # ---- cond_encoder1: Linear -> ReLU -> Linear -> ReLU -> Linear(->64) ----
    h = _relu(jnp.dot(cond, w1_ref[...], preferred_element_type=f32) + b1_ref[...])
    h = _relu(jnp.dot(h, w2_ref[...], preferred_element_type=f32) + b2_ref[...])
    c = jnp.dot(h, w3_ref[...], preferred_element_type=f32) + b3_ref[...]

    # ---- main on concat([z, c], dim=1) ----
    # [z | c] @ W4 == z @ W4[:z_dim] + c @ W4[z_dim:]  (exact); split done
    # wrapper-side so the kernel never slices.
    h = _relu(jnp.dot(z, w4z_ref[...], preferred_element_type=f32)
              + jnp.dot(c, w4c_ref[...], preferred_element_type=f32)
              + b4_ref[...])
    h = _relu(jnp.dot(h, w5_ref[...], preferred_element_type=f32) + b5_ref[...])
    h = _relu(jnp.dot(h, w6_ref[...], preferred_element_type=f32) + b6_ref[...])
    out = jnp.dot(h, w7_ref[...], preferred_element_type=f32) + b7_ref[...]

    out_ref[...] = out.astype(out_ref.dtype)


def _pad2(a, rows, cols):
    r, c = a.shape
    return jnp.pad(a, ((0, rows - r), (0, cols - c)))


def _prepare_params(params):
    """Split w4 and zero-pad all feature dims up to 128 lanes (exact)."""
    (w1, b1, w2, b2, w3, b3, w4, b4, w5, b5, w6, b6, w7, b7) = params
    w4z, w4c = w4[:Z_DIM, :], w4[Z_DIM:, :]
    return (
        _pad2(w1, COND_DIM, LANES), _pad2(b1, 1, LANES),
        _pad2(w2, LANES, LANES),    _pad2(b2, 1, LANES),
        _pad2(w3, LANES, LANES),    _pad2(b3, 1, LANES),
        _pad2(w4z, Z_DIM, LANES),   _pad2(w4c, LANES, LANES), _pad2(b4, 1, LANES),
        _pad2(w5, LANES, LANES),    _pad2(b5, 1, LANES),
        _pad2(w6, LANES, LANES),    _pad2(b6, 1, LANES),
        _pad2(w7, LANES, LANES),    _pad2(b7, 1, LANES),
    )


def _pick_tile(B):
    # Collapse the grid entirely for small batches; MXU-row-sized tiles otherwise.
    if B <= 256:
        return B
    for tm in (256, 128, 64, 32, 16, 8):
        if B % tm == 0:
            return tm
    return 8


def contact_vae_decoder(x, params):
    """x: (B, z_dim + cond_dim) f32 -> (B, input_dim) f32."""
    B, d_in = x.shape
    assert d_in == D_IN and B % 8 == 0

    tm = _pick_tile(B)
    assert B % tm == 0
    grid = (B // tm,)

    # Wrapper-side splits (free: just different DMA source views).
    z = x[:, :Z_DIM]
    cond = x[:, -COND_DIM:]
    padded = _prepare_params(params)

    def full_spec(arr):
        # Weights/biases: same full block every grid step (re-DMA skipped).
        return pl.BlockSpec(arr.shape, lambda i: (0, 0))

    out_padded = pl.pallas_call(
        _decoder_kernel,
        out_shape=jax.ShapeDtypeStruct((B, LANES), jnp.float32),
        grid_spec=pltpu.PrefetchScalarGridSpec(
            num_scalar_prefetch=0,
            grid=grid,
            in_specs=[
                pl.BlockSpec((tm, Z_DIM), lambda i: (i, 0)),
                pl.BlockSpec((tm, COND_DIM), lambda i: (i, 0)),
            ] + [full_spec(p) for p in padded],
            out_specs=pl.BlockSpec((tm, LANES), lambda i: (i, 0)),
        ),
        compiler_params=pltpu.CompilerParams(
            dimension_semantics=("parallel",),
        ),
    )(z, cond, *padded)

    return out_padded[:, :INPUT_DIM]


# ----------------------------- parameter init (deterministic) ----------------
def init_params(key):
    """Deterministic init; weights stored as (in, out), biases as (1, out)."""
    dims = [
        # cond_encoder1
        (COND_DIM, H_DIM),
        (H_DIM, H_DIM),
        (H_DIM, 64),
        # main
        (Z_DIM + 64, 32),
        (32, 32),
        (32, 16),
        (16, INPUT_DIM),
    ]
    params = []
    for (fan_in, fan_out) in dims:
        key, kw, kb = jax.random.split(key, 3)
        bound = 1.0 / (fan_in ** 0.5)   # PyTorch nn.Linear default uniform bound
        w = jax.random.uniform(kw, (fan_in, fan_out), jnp.float32, -bound, bound)
        b = jax.random.uniform(kb, (1, fan_out), jnp.float32, -bound, bound)
        params += [w, b]
    return tuple(params)


# ----------------------------- pure-JAX reference -----------------------------
def reference(x, params):
    (w1, b1, w2, b2, w3, b3, w4, b4, w5, b5, w6, b6, w7, b7) = params
    z = x[:, :Z_DIM]
    cond = x[:, -COND_DIM:]
    h = jax.nn.relu(cond @ w1 + b1)
    h = jax.nn.relu(h @ w2 + b2)
    c = h @ w3 + b3
    zc = jnp.concatenate([z, c], axis=1)
    h = jax.nn.relu(zc @ w4 + b4)
    h = jax.nn.relu(h @ w5 + b5)
    h = jax.nn.relu(h @ w6 + b6)
    return h @ w7 + b7


if __name__ == "__main__":
    key = jax.random.PRNGKey(0)
    key, kx, kp = jax.random.split(key, 3)

    x = jax.random.normal(kx, (BATCH, D_IN), jnp.float32)
    params = init_params(kp)

    out = contact_vae_decoder(x, params)
    out = jax.block_until_ready(out)

    ref = reference(x, params)
    assert out.shape == (BATCH, INPUT_DIM)
    assert jnp.allclose(out, ref, atol=1e-4, rtol=1e-4), "mismatch vs reference"

    print("KERNEL_OK")
</pallas_src>

<mosaic_0001>
module attributes {stable_mosaic.version = 11 : i64} {
  func.func @_decoder_kernel(%arg0: i32, %arg1: memref<16x8xf32, #tpu.memory_space<vmem>>, %arg2: memref<16x16xf32, #tpu.memory_space<vmem>>, %arg3: memref<16x128xf32, #tpu.memory_space<vmem>>, %arg4: memref<1x128xf32, #tpu.memory_space<vmem>>, %arg5: memref<128x128xf32, #tpu.memory_space<vmem>>, %arg6: memref<1x128xf32, #tpu.memory_space<vmem>>, %arg7: memref<128x128xf32, #tpu.memory_space<vmem>>, %arg8: memref<1x128xf32, #tpu.memory_space<vmem>>, %arg9: memref<8x128xf32, #tpu.memory_space<vmem>>, %arg10: memref<128x128xf32, #tpu.memory_space<vmem>>, %arg11: memref<1x128xf32, #tpu.memory_space<vmem>>, %arg12: memref<128x128xf32, #tpu.memory_space<vmem>>, %arg13: memref<1x128xf32, #tpu.memory_space<vmem>>, %arg14: memref<128x128xf32, #tpu.memory_space<vmem>>, %arg15: memref<1x128xf32, #tpu.memory_space<vmem>>, %arg16: memref<128x128xf32, #tpu.memory_space<vmem>>, %arg17: memref<1x128xf32, #tpu.memory_space<vmem>>, %arg18: memref<16x128xf32, #tpu.memory_space<vmem>>) attributes {dimension_semantics = [#tpu.dimension_semantics<parallel>], iteration_bounds = array<i64: 1>, scalar_prefetch = 0 : i64, scratch_operands = 0 : i64, tpu.core_type = #tpu.core_type<tc>, window_params = [{transform_indices = @transform_0, window_bounds = array<i64: 16, 8>}, {transform_indices = @transform_1, window_bounds = array<i64: 16, 16>}, {pipeline_mode = #tpu.pipeline_mode<synchronous>, transform_indices = @transform_2, window_bounds = array<i64: 16, 128>}, {pipeline_mode = #tpu.pipeline_mode<synchronous>, transform_indices = @transform_3, window_bounds = array<i64: 1, 128>}, {pipeline_mode = #tpu.pipeline_mode<synchronous>, transform_indices = @transform_4, window_bounds = array<i64: 128, 128>}, {pipeline_mode = #tpu.pipeline_mode<synchronous>, transform_indices = @transform_5, window_bounds = array<i64: 1, 128>}, {pipeline_mode = #tpu.pipeline_mode<synchronous>, transform_indices = @transform_6, window_bounds = array<i64: 128, 128>}, {pipeline_mode = #tpu.pipeline_mode<synchronous>, transform_indices = @transform_7, window_bounds = array<i64: 1, 128>}, {pipeline_mode = #tpu.pipeline_mode<synchronous>, transform_indices = @transform_8, window_bounds = array<i64: 8, 128>}, {pipeline_mode = #tpu.pipeline_mode<synchronous>, transform_indices = @transform_9, window_bounds = array<i64: 128, 128>}, {pipeline_mode = #tpu.pipeline_mode<synchronous>, transform_indices = @transform_10, window_bounds = array<i64: 1, 128>}, {pipeline_mode = #tpu.pipeline_mode<synchronous>, transform_indices = @transform_11, window_bounds = array<i64: 128, 128>}, {pipeline_mode = #tpu.pipeline_mode<synchronous>, transform_indices = @transform_12, window_bounds = array<i64: 1, 128>}, {pipeline_mode = #tpu.pipeline_mode<synchronous>, transform_indices = @transform_13, window_bounds = array<i64: 128, 128>}, {pipeline_mode = #tpu.pipeline_mode<synchronous>, transform_indices = @transform_14, window_bounds = array<i64: 1, 128>}, {pipeline_mode = #tpu.pipeline_mode<synchronous>, transform_indices = @transform_15, window_bounds = array<i64: 128, 128>}, {pipeline_mode = #tpu.pipeline_mode<synchronous>, transform_indices = @transform_16, window_bounds = array<i64: 1, 128>}, {transform_indices = @transform_17, window_bounds = array<i64: 16, 128>}]} {
    %c0 = arith.constant 0 : index
    %c0_0 = arith.constant 0 : index
    %0 = vector.load %arg1[%c0, %c0_0] : memref<16x8xf32, #tpu.memory_space<vmem>>, vector<16x8xf32>
    %c0_1 = arith.constant 0 : index
    %c0_2 = arith.constant 0 : index
    %1 = vector.load %arg2[%c0_1, %c0_2] : memref<16x16xf32, #tpu.memory_space<vmem>>, vector<16x16xf32>
    %c0_3 = arith.constant 0 : index
    %c0_4 = arith.constant 0 : index
    %2 = vector.load %arg3[%c0_3, %c0_4] : memref<16x128xf32, #tpu.memory_space<vmem>>, vector<16x128xf32>
    %cst = arith.constant dense<0.000000e+00> : vector<16x128xf32>
    %3 = tpu.matmul %1, %2, %cst {dimension_numbers = #tpu.dot_dimension_numbers<[1], [0], [0], [1], [0, 0, 1, 1], [], []>} : vector<16x16xf32>, vector<16x128xf32>, vector<16x128xf32> -> vector<16x128xf32>
    %c0_5 = arith.constant 0 : index
    %c0_6 = arith.constant 0 : index
    %4 = vector.load %arg4[%c0_5, %c0_6] : memref<1x128xf32, #tpu.memory_space<vmem>>, vector<1x128xf32>
    %5 = vector.broadcast %4 : vector<1x128xf32> to vector<16x128xf32>
    %6 = arith.addf %3, %5 : vector<16x128xf32>
    %cst_7 = arith.constant 0.000000e+00 : f32
    %7 = vector.broadcast %cst_7 : f32 to vector<16x128xf32>
    %8 = arith.maximumf %6, %7 : vector<16x128xf32>
    %c0_8 = arith.constant 0 : index
    %c0_9 = arith.constant 0 : index
    %9 = vector.load %arg5[%c0_8, %c0_9] : memref<128x128xf32, #tpu.memory_space<vmem>>, vector<128x128xf32>
    %cst_10 = arith.constant dense<0.000000e+00> : vector<16x128xf32>
    %10 = tpu.matmul %8, %9, %cst_10 {dimension_numbers = #tpu.dot_dimension_numbers<[1], [0], [0], [1], [0, 0, 1, 1], [], []>} : vector<16x128xf32>, vector<128x128xf32>, vector<16x128xf32> -> vector<16x128xf32>
    %c0_11 = arith.constant 0 : index
    %c0_12 = arith.constant 0 : index
    %11 = vector.load %arg6[%c0_11, %c0_12] : memref<1x128xf32, #tpu.memory_space<vmem>>, vector<1x128xf32>
    %12 = vector.broadcast %11 : vector<1x128xf32> to vector<16x128xf32>
    %13 = arith.addf %10, %12 : vector<16x128xf32>
    %cst_13 = arith.constant 0.000000e+00 : f32
    %14 = vector.broadcast %cst_13 : f32 to vector<16x128xf32>
    %15 = arith.maximumf %13, %14 : vector<16x128xf32>
    %c0_14 = arith.constant 0 : index
    %c0_15 = arith.constant 0 : index
    %16 = vector.load %arg7[%c0_14, %c0_15] : memref<128x128xf32, #tpu.memory_space<vmem>>, vector<128x128xf32>
    %cst_16 = arith.constant dense<0.000000e+00> : vector<16x128xf32>
    %17 = tpu.matmul %15, %16, %cst_16 {dimension_numbers = #tpu.dot_dimension_numbers<[1], [0], [0], [1], [0, 0, 1, 1], [], []>} : vector<16x128xf32>, vector<128x128xf32>, vector<16x128xf32> -> vector<16x128xf32>
    %c0_17 = arith.constant 0 : index
    %c0_18 = arith.constant 0 : index
    %18 = vector.load %arg8[%c0_17, %c0_18] : memref<1x128xf32, #tpu.memory_space<vmem>>, vector<1x128xf32>
    %19 = vector.broadcast %18 : vector<1x128xf32> to vector<16x128xf32>
    %20 = arith.addf %17, %19 : vector<16x128xf32>
    %c0_19 = arith.constant 0 : index
    %c0_20 = arith.constant 0 : index
    %21 = vector.load %arg9[%c0_19, %c0_20] : memref<8x128xf32, #tpu.memory_space<vmem>>, vector<8x128xf32>
    %cst_21 = arith.constant dense<0.000000e+00> : vector<16x128xf32>
    %22 = tpu.matmul %0, %21, %cst_21 {dimension_numbers = #tpu.dot_dimension_numbers<[1], [0], [0], [1], [0, 0, 1, 1], [], []>} : vector<16x8xf32>, vector<8x128xf32>, vector<16x128xf32> -> vector<16x128xf32>
    %c0_22 = arith.constant 0 : index
    %c0_23 = arith.constant 0 : index
    %23 = vector.load %arg10[%c0_22, %c0_23] : memref<128x128xf32, #tpu.memory_space<vmem>>, vector<128x128xf32>
    %cst_24 = arith.constant dense<0.000000e+00> : vector<16x128xf32>
    %24 = tpu.matmul %20, %23, %cst_24 {dimension_numbers = #tpu.dot_dimension_numbers<[1], [0], [0], [1], [0, 0, 1, 1], [], []>} : vector<16x128xf32>, vector<128x128xf32>, vector<16x128xf32> -> vector<16x128xf32>
    %25 = arith.addf %22, %24 : vector<16x128xf32>
    %c0_25 = arith.constant 0 : index
    %c0_26 = arith.constant 0 : index
    %26 = vector.load %arg11[%c0_25, %c0_26] : memref<1x128xf32, #tpu.memory_space<vmem>>, vector<1x128xf32>
    %27 = vector.broadcast %26 : vector<1x128xf32> to vector<16x128xf32>
    %28 = arith.addf %25, %27 : vector<16x128xf32>
    %cst_27 = arith.constant 0.000000e+00 : f32
    %29 = vector.broadcast %cst_27 : f32 to vector<16x128xf32>
    %30 = arith.maximumf %28, %29 : vector<16x128xf32>
    %c0_28 = arith.constant 0 : index
    %c0_29 = arith.constant 0 : index
    %31 = vector.load %arg12[%c0_28, %c0_29] : memref<128x128xf32, #tpu.memory_space<vmem>>, vector<128x128xf32>
    %cst_30 = arith.constant dense<0.000000e+00> : vector<16x128xf32>
    %32 = tpu.matmul %30, %31, %cst_30 {dimension_numbers = #tpu.dot_dimension_numbers<[1], [0], [0], [1], [0, 0, 1, 1], [], []>} : vector<16x128xf32>, vector<128x128xf32>, vector<16x128xf32> -> vector<16x128xf32>
    %c0_31 = arith.constant 0 : index
    %c0_32 = arith.constant 0 : index
    %33 = vector.load %arg13[%c0_31, %c0_32] : memref<1x128xf32, #tpu.memory_space<vmem>>, vector<1x128xf32>
    %34 = vector.broadcast %33 : vector<1x128xf32> to vector<16x128xf32>
    %35 = arith.addf %32, %34 : vector<16x128xf32>
    %cst_33 = arith.constant 0.000000e+00 : f32
    %36 = vector.broadcast %cst_33 : f32 to vector<16x128xf32>
    %37 = arith.maximumf %35, %36 : vector<16x128xf32>
    %c0_34 = arith.constant 0 : index
    %c0_35 = arith.constant 0 : index
    %38 = vector.load %arg14[%c0_34, %c0_35] : memref<128x128xf32, #tpu.memory_space<vmem>>, vector<128x128xf32>
    %cst_36 = arith.constant dense<0.000000e+00> : vector<16x128xf32>
    %39 = tpu.matmul %37, %38, %cst_36 {dimension_numbers = #tpu.dot_dimension_numbers<[1], [0], [0], [1], [0, 0, 1, 1], [], []>} : vector<16x128xf32>, vector<128x128xf32>, vector<16x128xf32> -> vector<16x128xf32>
    %c0_37 = arith.constant 0 : index
    %c0_38 = arith.constant 0 : index
    %40 = vector.load %arg15[%c0_37, %c0_38] : memref<1x128xf32, #tpu.memory_space<vmem>>, vector<1x128xf32>
    %41 = vector.broadcast %40 : vector<1x128xf32> to vector<16x128xf32>
    %42 = arith.addf %39, %41 : vector<16x128xf32>
    %cst_39 = arith.constant 0.000000e+00 : f32
    %43 = vector.broadcast %cst_39 : f32 to vector<16x128xf32>
    %44 = arith.maximumf %42, %43 : vector<16x128xf32>
    %c0_40 = arith.constant 0 : index
    %c0_41 = arith.constant 0 : index
    %45 = vector.load %arg16[%c0_40, %c0_41] : memref<128x128xf32, #tpu.memory_space<vmem>>, vector<128x128xf32>
    %cst_42 = arith.constant dense<0.000000e+00> : vector<16x128xf32>
    %46 = tpu.matmul %44, %45, %cst_42 {dimension_numbers = #tpu.dot_dimension_numbers<[1], [0], [0], [1], [0, 0, 1, 1], [], []>} : vector<16x128xf32>, vector<128x128xf32>, vector<16x128xf32> -> vector<16x128xf32>
    %c0_43 = arith.constant 0 : index
    %c0_44 = arith.constant 0 : index
    %47 = vector.load %arg17[%c0_43, %c0_44] : memref<1x128xf32, #tpu.memory_space<vmem>>, vector<1x128xf32>
    %48 = vector.broadcast %47 : vector<1x128xf32> to vector<16x128xf32>
    %49 = arith.addf %46, %48 : vector<16x128xf32>
    %c0_45 = arith.constant 0 : index
    %c0_46 = arith.constant 0 : index
    %50 = vector.load %arg18[%c0_45, %c0_46] : memref<16x128xf32, #tpu.memory_space<vmem>>, vector<16x128xf32>
    tpu.vector_store %arg18[%c0_45, %c0_46], %49 {strides = array<i32>} : memref<16x128xf32, #tpu.memory_space<vmem>>, vector<16x128xf32>,
    return
  }
  func.func @transform_0(%arg0: i32) -> (i32, i32) {
    %c0_i32 = arith.constant 0 : i32
    %c0_i32_0 = arith.constant 0 : i32
    return %arg0, %c0_i32 : i32, i32
  }
  func.func @transform_1(%arg0: i32) -> (i32, i32) {
    %c0_i32 = arith.constant 0 : i32
    %c0_i32_0 = arith.constant 0 : i32
    return %arg0, %c0_i32 : i32, i32
  }
  func.func @transform_2(%arg0: i32) -> (i32, i32) {
    %c0_i32 = arith.constant 0 : i32
    %c0_i32_0 = arith.constant 0 : i32
    %c0_i32_1 = arith.constant 0 : i32
    return %c0_i32, %c0_i32_0 : i32, i32
  }
  func.func @transform_3(%arg0: i32) -> (i32, i32) {
    %c0_i32 = arith.constant 0 : i32
    %c0_i32_0 = arith.constant 0 : i32
    %c0_i32_1 = arith.constant 0 : i32
    return %c0_i32, %c0_i32_0 : i32, i32
  }
  func.func @transform_4(%arg0: i32) -> (i32, i32) {
    %c0_i32 = arith.constant 0 : i32
    %c0_i32_0 = arith.constant 0 : i32
    %c0_i32_1 = arith.constant 0 : i32
    return %c0_i32, %c0_i32_0 : i32, i32
  }
  func.func @transform_5(%arg0: i32) -> (i32, i32) {
    %c0_i32 = arith.constant 0 : i32
    %c0_i32_0 = arith.constant 0 : i32
    %c0_i32_1 = arith.constant 0 : i32
    return %c0_i32, %c0_i32_0 : i32, i32
  }
  func.func @transform_6(%arg0: i32) -> (i32, i32) {
    %c0_i32 = arith.constant 0 : i32
    %c0_i32_0 = arith.constant 0 : i32
    %c0_i32_1 = arith.constant 0 : i32
    return %c0_i32, %c0_i32_0 : i32, i32
  }
  func.func @transform_7(%arg0: i32) -> (i32, i32) {
    %c0_i32 = arith.constant 0 : i32
    %c0_i32_0 = arith.constant 0 : i32
    %c0_i32_1 = arith.constant 0 : i32
    return %c0_i32, %c0_i32_0 : i32, i32
  }
  func.func @transform_8(%arg0: i32) -> (i32, i32) {
    %c0_i32 = arith.constant 0 : i32
    %c0_i32_0 = arith.constant 0 : i32
    %c0_i32_1 = arith.constant 0 : i32
    return %c0_i32, %c0_i32_0 : i32, i32
  }
  func.func @transform_9(%arg0: i32) -> (i32, i32) {
    %c0_i32 = arith.constant 0 : i32
    %c0_i32_0 = arith.constant 0 : i32
    %c0_i32_1 = arith.constant 0 : i32
    return %c0_i32, %c0_i32_0 : i32, i32
  }
  func.func @transform_10(%arg0: i32) -> (i32, i32) {
    %c0_i32 = arith.constant 0 : i32
    %c0_i32_0 = arith.constant 0 : i32
    %c0_i32_1 = arith.constant 0 : i32
    return %c0_i32, %c0_i32_0 : i32, i32
  }
  func.func @transform_11(%arg0: i32) -> (i32, i32) {
    %c0_i32 = arith.constant 0 : i32
    %c0_i32_0 = arith.constant 0 : i32
    %c0_i32_1 = arith.constant 0 : i32
    return %c0_i32, %c0_i32_0 : i32, i32
  }
  func.func @transform_12(%arg0: i32) -> (i32, i32) {
    %c0_i32 = arith.constant 0 : i32
    %c0_i32_0 = arith.constant 0 : i32
    %c0_i32_1 = arith.constant 0 : i32
    return %c0_i32, %c0_i32_0 : i32, i32
  }
  func.func @transform_13(%arg0: i32) -> (i32, i32) {
    %c0_i32 = arith.constant 0 : i32
    %c0_i32_0 = arith.constant 0 : i32
    %c0_i32_1 = arith.constant 0 : i32
    return %c0_i32, %c0_i32_0 : i32, i32
  }
  func.func @transform_14(%arg0: i32) -> (i32, i32) {
    %c0_i32 = arith.constant 0 : i32
    %c0_i32_0 = arith.constant 0 : i32
    %c0_i32_1 = arith.constant 0 : i32
    return %c0_i32, %c0_i32_0 : i32, i32
  }
  func.func @transform_15(%arg0: i32) -> (i32, i32) {
    %c0_i32 = arith.constant 0 : i32
    %c0_i32_0 = arith.constant 0 : i32
    %c0_i32_1 = arith.constant 0 : i32
    return %c0_i32, %c0_i32_0 : i32, i32
  }
  func.func @transform_16(%arg0: i32) -> (i32, i32) {
    %c0_i32 = arith.constant 0 : i32
    %c0_i32_0 = arith.constant 0 : i32
    %c0_i32_1 = arith.constant 0 : i32
    return %c0_i32, %c0_i32_0 : i32, i32
  }
  func.func @transform_17(%arg0: i32) -> (i32, i32) {
    %c0_i32 = arith.constant 0 : i32
    %c0_i32_0 = arith.constant 0 : i32
    return %arg0, %c0_i32 : i32, i32
  }
}

</mosaic_0001>

<llo_original>
// kernel: tpu_custom_call.1
$region0: #{tpu_custom_call.1}
  #allocation0 [shape = 'u32[]', space=smem, size = 0x4, offset = 0x4, fixed_abs, tag = 'smem constant byte address 0x4 - core index']
  #allocation1 [shape = 'u32[144,128]{1,0:T(1,128)}', space=vmem, size = 0x12000, scoped, tag = 'internal scratch']
  %s0 = inlined_call_operand.vmem [shape: f32[16,8], index: 0, kind: input, shape index: {}]
  %s1 = inlined_call_operand.vmem [shape: f32[16,16], index: 1, kind: input, shape index: {}]
  %s2 = inlined_call_operand.hbm [shape: f32[16,128], index: 2, kind: input, shape index: {}]
  %s3 = inlined_call_operand.vmem [shape: f32[1,128], index: 3, kind: input, shape index: {}]
  %s4 = inlined_call_operand.hbm [shape: f32[128,128], index: 4, kind: input, shape index: {}]
  %s5 = inlined_call_operand.vmem [shape: f32[1,128], index: 5, kind: input, shape index: {}]
  %s6 = inlined_call_operand.hbm [shape: f32[128,128], index: 6, kind: input, shape index: {}]
  %s7 = inlined_call_operand.vmem [shape: f32[1,128], index: 7, kind: input, shape index: {}]
  %s8 = inlined_call_operand.vmem [shape: f32[8,128], index: 8, kind: input, shape index: {}]
  %s9 = inlined_call_operand.hbm [shape: f32[128,128], index: 9, kind: input, shape index: {}]
  %s10 = inlined_call_operand.vmem [shape: f32[1,128], index: 10, kind: input, shape index: {}]
  %s11 = inlined_call_operand.hbm [shape: f32[128,128], index: 11, kind: input, shape index: {}]
  %s12 = inlined_call_operand.vmem [shape: f32[1,128], index: 12, kind: input, shape index: {}]
  %s13 = inlined_call_operand.hbm [shape: f32[128,128], index: 13, kind: input, shape index: {}]
  %s14 = inlined_call_operand.vmem [shape: f32[1,128], index: 14, kind: input, shape index: {}]
  %s15 = inlined_call_operand.hbm [shape: f32[128,128], index: 15, kind: input, shape index: {}]
  %s16 = inlined_call_operand.vmem [shape: f32[1,128], index: 16, kind: input, shape index: {}]
  %s17 = inlined_call_operand.hbm [shape: f32[16,128], index: 17, kind: output, shape index: {}]
  %s18 = sld [smem:[#allocation0]]
  $region106: #{tpu_custom_call.1} parent=0
    _
  %s20 = ssub.s32 1, %s18
  %s21 = scalar_select 0, %s20, %s18
  $region1: #{tpu_custom_call.1} parent=0
    #allocation2 [shape = 'u8[8192]{0}', space=vmem, size = 0x2000, scoped, tag = 'input window, operand 2, single buffered']
    #allocation3 [shape = 's32[1]{0}', space=sflag, size = 0x4, scoped, tag = 'scoped memory for tpu_custom_call.1']
    #allocation4 [shape = 's32[1]{0}', space=sflag, size = 0x4, scoped, tag = 'scoped memory for tpu_custom_call.1']
    #allocation5 [shape = 'u8[65536]{0}', space=vmem, size = 0x10000, scoped, tag = 'input window, operand 4, single buffered']
    #allocation6 [shape = 's32[1]{0}', space=sflag, size = 0x4, scoped, tag = 'scoped memory for tpu_custom_call.1']
    #allocation7 [shape = 'u8[65536]{0}', space=vmem, size = 0x10000, scoped, tag = 'input window, operand 6, single buffered']
    #allocation8 [shape = 'u8[65536]{0}', space=vmem, size = 0x10000, scoped, tag = 'input window, operand 9, single buffered']
    #allocation9 [shape = 's32[1]{0}', space=sflag, size = 0x4, scoped, tag = 'scoped memory for tpu_custom_call.1']
    #allocation10 [shape = 'u8[65536]{0}', space=vmem, size = 0x10000, scoped, tag = 'input window, operand 11, single buffered']
    #allocation11 [shape = 'u8[65536]{0}', space=vmem, size = 0x10000, scoped, tag = 'input window, operand 13, single buffered']
    #allocation12 [shape = 's32[1]{0}', space=sflag, size = 0x4, scoped, tag = 'scoped memory for tpu_custom_call.1']
    #allocation13 [shape = 'u8[65536]{0}', space=vmem, size = 0x10000, scoped, tag = 'input window, operand 15, single buffered']
    #allocation14 [shape = 'u8[8192]{0}', space=vmem, size = 0x2000, scoped, tag = 'output window, operand 0, single buffered']
    %22 = vsyncpa [#allocation3], 0
    %23 = vsyncpa [#allocation6], 0
    %24 = vsyncpa [#allocation9], 0
    %25 = vsyncpa [#allocation12], 0
    %26 = vsyncpa [#allocation4], 0
    // Predicated region
    $region2: #{tpu_custom_call.1} parent=1 // pred_check
      _
    $region3: #{tpu_custom_call.1} parent=1 // pred_check_branch
      %28 = sbr.rel (0) target = $region5
    $region4: #{tpu_custom_call.1} parent=1 // pred_region
      _
    $region5: #{tpu_custom_call.1} parent=1 // pred_fallthru
      _
    // Predicated region
    $region6: #{tpu_custom_call.1} parent=1 // pred_check
      _
    $region7: #{tpu_custom_call.1} parent=1 // pred_check_branch
      %30 = sbr.rel (0) target = $region9
    $region8: #{tpu_custom_call.1} parent=1 // pred_region
      _
    $region9: #{tpu_custom_call.1} parent=1 // pred_fallthru
      _
    // Predicated region
    $region10: #{tpu_custom_call.1} parent=1 // pred_check
      _
    $region11: #{tpu_custom_call.1} parent=1 // pred_check_branch
      %32 = sbr.rel (0) target = $region13
    $region12: #{tpu_custom_call.1} parent=1 // pred_region
      %s34 = ssub.s32 256, 256
      %35 = vsyncadd [#allocation3], %s34
      %s36 = sshll.u32 [#allocation2], 4
      %s37 = int_to_ptr.vmem [resolvable:$true] %s36
      %42 = dma.hbm_to_vmem [thread:$0]  %s2, 256, %s37, [#allocation3], 128, 128, 8
    $region13: #{tpu_custom_call.1} parent=1 // pred_fallthru
      _
    // Predicated region
    $region14: #{tpu_custom_call.1} parent=1 // pred_check
      _
    $region15: #{tpu_custom_call.1} parent=1 // pred_check_branch
      %44 = sbr.rel (0) target = $region17
    $region16: #{tpu_custom_call.1} parent=1 // pred_region
      _
    $region17: #{tpu_custom_call.1} parent=1 // pred_fallthru
      _
    // Predicated region
    $region18: #{tpu_custom_call.1} parent=1 // pred_check
      _
    $region19: #{tpu_custom_call.1} parent=1 // pred_check_branch
      %46 = sbr.rel (0) target = $region21
    $region20: #{tpu_custom_call.1} parent=1 // pred_region
      %s48 = ssub.s32 2048, 2048
      %49 = vsyncadd [#allocation6], %s48
      %s50 = sshll.u32 [#allocation5], 4
      %s51 = int_to_ptr.vmem [resolvable:$true] %s50
      %56 = dma.hbm_to_vmem [thread:$0]  %s4, 2048, %s51, [#allocation6], 128, 128, 8
    $region21: #{tpu_custom_call.1} parent=1 // pred_fallthru
      _
    // Predicated region
    $region22: #{tpu_custom_call.1} parent=1 // pred_check
      _
    $region23: #{tpu_custom_call.1} parent=1 // pred_check_branch
      %58 = sbr.rel (0) target = $region25
    $region24: #{tpu_custom_call.1} parent=1 // pred_region
      _
    $region25: #{tpu_custom_call.1} parent=1 // pred_fallthru
      _
    // Predicated region
    $region26: #{tpu_custom_call.1} parent=1 // pred_check
      _
    $region27: #{tpu_custom_call.1} parent=1 // pred_check_branch
      %60 = sbr.rel (0) target = $region29
    $region28: #{tpu_custom_call.1} parent=1 // pred_region
      %s62 = ssub.s32 2048, 2048
      %63 = vsyncadd [#allocation6], %s62
      %s64 = sshll.u32 [#allocation7], 4
      %s65 = int_to_ptr.vmem [resolvable:$true] %s64
      %70 = dma.hbm_to_vmem [thread:$0]  %s6, 2048, %s65, [#allocation6], 128, 128, 8
    $region29: #{tpu_custom_call.1} parent=1 // pred_fallthru
      _
    // Predicated region
    $region30: #{tpu_custom_call.1} parent=1 // pred_check
      _
    $region31: #{tpu_custom_call.1} parent=1 // pred_check_branch
      %72 = sbr.rel (0) target = $region33
    $region32: #{tpu_custom_call.1} parent=1 // pred_region
      _
    $region33: #{tpu_custom_call.1} parent=1 // pred_fallthru
      _
    // Predicated region
    $region34: #{tpu_custom_call.1} parent=1 // pred_check
      _
    $region35: #{tpu_custom_call.1} parent=1 // pred_check_branch
      %74 = sbr.rel (0) target = $region37
    $region36: #{tpu_custom_call.1} parent=1 // pred_region
      _
    $region37: #{tpu_custom_call.1} parent=1 // pred_fallthru
      _
    // Predicated region
    $region38: #{tpu_custom_call.1} parent=1 // pred_check
      _
    $region39: #{tpu_custom_call.1} parent=1 // pred_check_branch
      %76 = sbr.rel (0) target = $region41
    $region40: #{tpu_custom_call.1} parent=1 // pred_region
      %s78 = ssub.s32 2048, 2048
      %79 = vsyncadd [#allocation9], %s78
      %s80 = sshll.u32 [#allocation8], 4
      %s81 = int_to_ptr.vmem [resolvable:$true] %s80
      %86 = dma.hbm_to_vmem [thread:$0]  %s9, 2048, %s81, [#allocation9], 128, 128, 8
    $region41: #{tpu_custom_call.1} parent=1 // pred_fallthru
      _
    // Predicated region
    $region42: #{tpu_custom_call.1} parent=1 // pred_check
      _
    $region43: #{tpu_custom_call.1} parent=1 // pred_check_branch
      %88 = sbr.rel (0) target = $region45
    $region44: #{tpu_custom_call.1} parent=1 // pred_region
      _
    $region45: #{tpu_custom_call.1} parent=1 // pred_fallthru
      _
    // Predicated region
    $region46: #{tpu_custom_call.1} parent=1 // pred_check
      _
    $region47: #{tpu_custom_call.1} parent=1 // pred_check_branch
      %90 = sbr.rel (0) target = $region49
    $region48: #{tpu_custom_call.1} parent=1 // pred_region
      %s92 = ssub.s32 2048, 2048
      %93 = vsyncadd [#allocation9], %s92
      %s94 = sshll.u32 [#allocation10], 4
      %s95 = int_to_ptr.vmem [resolvable:$true] %s94
      %100 = dma.hbm_to_vmem [thread:$0]  %s11, 2048, %s95, [#allocation9], 128, 128, 8
    $region49: #{tpu_custom_call.1} parent=1 // pred_fallthru
      _
    // Predicated region
    $region50: #{tpu_custom_call.1} parent=1 // pred_check
      _
    $region51: #{tpu_custom_call.1} parent=1 // pred_check_branch
      %102 = sbr.rel (0) target = $region53
    $region52: #{tpu_custom_call.1} parent=1 // pred_region
      _
    $region53: #{tpu_custom_call.1} parent=1 // pred_fallthru
      _
    // Predicated region
    $region54: #{tpu_custom_call.1} parent=1 // pred_check
      _
    $region55: #{tpu_custom_call.1} parent=1 // pred_check_branch
      %104 = sbr.rel (0) target = $region57
    $region56: #{tpu_custom_call.1} parent=1 // pred_region
      %s106 = ssub.s32 2048, 2048
      %107 = vsyncadd [#allocation12], %s106
      %s108 = sshll.u32 [#allocation11], 4
      %s109 = int_to_ptr.vmem [resolvable:$true] %s108
      %114 = dma.hbm_to_vmem [thread:$0]  %s13, 2048, %s109, [#allocation12], 128, 128, 8
    $region57: #{tpu_custom_call.1} parent=1 // pred_fallthru
      _
    // Predicated region
    $region58: #{tpu_custom_call.1} parent=1 // pred_check
      _
    $region59: #{tpu_custom_call.1} parent=1 // pred_check_branch
      %116 = sbr.rel (0) target = $region61
    $region60: #{tpu_custom_call.1} parent=1 // pred_region
      _
    $region61: #{tpu_custom_call.1} parent=1 // pred_fallthru
      _
    // Predicated region
    $region62: #{tpu_custom_call.1} parent=1 // pred_check
      _
    $region63: #{tpu_custom_call.1} parent=1 // pred_check_branch
      %118 = sbr.rel (0) target = $region65
    $region64: #{tpu_custom_call.1} parent=1 // pred_region
      %s120 = ssub.s32 2048, 2048
      %121 = vsyncadd [#allocation12], %s120
      %s122 = sshll.u32 [#allocation13], 4
      %s123 = int_to_ptr.vmem [resolvable:$true] %s122
      %128 = dma.hbm_to_vmem [thread:$0]  %s15, 2048, %s123, [#allocation12], 128, 128, 8
    $region65: #{tpu_custom_call.1} parent=1 // pred_fallthru
      _
    // Predicated region
    $region66: #{tpu_custom_call.1} parent=1 // pred_check
      _
    $region67: #{tpu_custom_call.1} parent=1 // pred_check_branch
      %130 = sbr.rel (0) target = $region69
    $region68: #{tpu_custom_call.1} parent=1 // pred_region
      _
    $region69: #{tpu_custom_call.1} parent=1 // pred_fallthru
      _
    // Predicated region
    $region70: #{tpu_custom_call.1} parent=1 // pred_check
      _
    $region71: #{tpu_custom_call.1} parent=1 // pred_check_branch
      %132 = sbr.rel (0) target = $region73
    $region72: #{tpu_custom_call.1} parent=1 // pred_region
      %133 = dma.done [#allocation3], 256
    $region73: #{tpu_custom_call.1} parent=1 // pred_fallthru
      _
    // Predicated region
    $region74: #{tpu_custom_call.1} parent=1 // pred_check
      _
    $region75: #{tpu_custom_call.1} parent=1 // pred_check_branch
      %135 = sbr.rel (0) target = $region77
    $region76: #{tpu_custom_call.1} parent=1 // pred_region
      %136 = dma.done [#allocation6], 2048
    $region77: #{tpu_custom_call.1} parent=1 // pred_fallthru
      _
    // Predicated region
    $region78: #{tpu_custom_call.1} parent=1 // pred_check
      _
    $region79: #{tpu_custom_call.1} parent=1 // pred_check_branch
      %138 = sbr.rel (0) target = $region81
    $region80: #{tpu_custom_call.1} parent=1 // pred_region
      %139 = dma.done [#allocation6], 2048
    $region81: #{tpu_custom_call.1} parent=1 // pred_fallthru
      _
    // Predicated region
    $region82: #{tpu_custom_call.1} parent=1 // pred_check
      _
    $region83: #{tpu_custom_call.1} parent=1 // pred_check_branch
      %141 = sbr.rel (0) target = $region85
    $region84: #{tpu_custom_call.1} parent=1 // pred_region
      %142 = dma.done [#allocation9], 2048
    $region85: #{tpu_custom_call.1} parent=1 // pred_fallthru
      _
    // Predicated region
    $region86: #{tpu_custom_call.1} parent=1 // pred_check
      _
    $region87: #{tpu_custom_call.1} parent=1 // pred_check_branch
      %144 = sbr.rel (0) target = $region89
    $region88: #{tpu_custom_call.1} parent=1 // pred_region
      %145 = dma.done [#allocation9], 2048
    $region89: #{tpu_custom_call.1} parent=1 // pred_fallthru
      _
    // Predicated region
    $region90: #{tpu_custom_call.1} parent=1 // pred_check
      _
    $region91: #{tpu_custom_call.1} parent=1 // pred_check_branch
      %147 = sbr.rel (0) target = $region93
    $region92: #{tpu_custom_call.1} parent=1 // pred_region
      %148 = dma.done [#allocation12], 2048
    $region93: #{tpu_custom_call.1} parent=1 // pred_fallthru
      _
    // Predicated region
    $region94: #{tpu_custom_call.1} parent=1 // pred_check
      _
    $region95: #{tpu_custom_call.1} parent=1 // pred_check_branch
      %150 = sbr.rel (0) target = $region97
    $region96: #{tpu_custom_call.1} parent=1 // pred_region
      %151 = dma.done [#allocation12], 2048
    $region97: #{tpu_custom_call.1} parent=1 // pred_fallthru
      _
    %v152 = vld [vmem:[%s0] sm:$0xff]
    %v153 = vld [vmem:[%s0 + $0x8] sm:$0xff]
    %v154 = vld [vmem:[%s1] sm:$0xff]
    %v155 = vld [vmem:[%s1 + $0x8] sm:$0xff]
    %v156 = vld [vmem:[#allocation2] sm:$0xff]
    %v157 = vld [vmem:[#allocation2 + $0x8] sm:$0xff]
    %v158 = vld [vmem:[%s3] sm:$0x1]
    %v160 = vlaneseq
    %v161 = vshrl.u32 %v160, 7
    %v162 = vsub.s32 0, %v161
    %v163 = vrot.slane %v158, %v162
    %vm165 = vcmask 130048
    %v167 = vsel %vm165, %v154, 0
    %v170 = vsel %vm165, %v155, 0
    %172 = vmatprep.subr.mxu0 0.0
    %173 = vmatpush1.msra.mxu0 %v156
    %174 = vmatprep.subr.mxu0 0.0
    %175 = vmatpush1.msra.mxu0 %v157
    %176 = vmatprep.subr.mxu0 0.0
    %177 = vmatpush1.msra.mxu0 0.0
    %178 = vmatprep.subr.mxu0 0.0
    %179 = vmatpush1.msra.mxu0 0.0
    %180 = vmatprep.subr.mxu0 0.0
    %181 = vmatpush1.msra.mxu0 0.0
    %182 = vmatprep.subr.mxu0 0.0
    %183 = vmatpush1.msra.mxu0 0.0
    %184 = vmatprep.subr.mxu0 0.0
    %185 = vmatpush1.msra.mxu0 0.0
    %186 = vmatprep.subr.mxu0 0.0
    %187 = vmatpush1.msra.mxu0 0.0
    %188 = vmatprep.subr.mxu0 0.0
    %189 = vmatpush1.msra.mxu0 0.0
    %190 = vmatprep.subr.mxu0 0.0
    %191 = vmatpush1.msra.mxu0 0.0
    %192 = vmatprep.subr.mxu0 0.0
    %193 = vmatpush1.msra.mxu0 0.0
    %194 = vmatprep.subr.mxu0 0.0
    %195 = vmatpush1.msra.mxu0 0.0
    %196 = vmatprep.subr.mxu0 0.0
    %197 = vmatpush1.msra.mxu0 0.0
    %198 = vmatprep.subr.mxu0 0.0
    %199 = vmatpush1.msra.mxu0 0.0
    %200 = vmatprep.subr.mxu0 0.0
    %201 = vmatpush1.msra.mxu0 0.0
    %202 = vmatprep.subr.mxu0 0.0
    %203 = vmatpush1.msra.mxu0 0.0
    %204 = vmatprep.subr.mxu0 0.0
    %205 = vmatpush1.msra.mxu0 0.0
    %206 = vmatprep.subr.mxu0 0.0
    %207 = vmatpush1.msra.mxu0 0.0
    %208 = vmatprep.subr.mxu0 0.0
    %209 = vmatpush1.msra.mxu0 0.0
    %210 = vmatprep.subr.mxu0 0.0
    %211 = vmatpush1.msra.mxu0 0.0
    %212 = vmatprep.subr.mxu0 0.0
    %213 = vmatpush1.msra.mxu0 0.0
    %214 = vmatprep.subr.mxu0 0.0
    %215 = vmatpush1.msra.mxu0 0.0
    %216 = vmatprep.subr.mxu0 0.0
    %217 = vmatpush1.msra.mxu0 0.0
    %218 = vmatprep.subr.mxu0 0.0
    %219 = vmatpush1.msra.mxu0 0.0
    %220 = vmatprep.subr.mxu0 0.0
    %221 = vmatpush1.msra.mxu0 0.0
    %222 = vmatprep.subr.mxu0 0.0
    %223 = vmatpush1.msra.mxu0 0.0
    %224 = vmatprep.subr.mxu0 0.0
    %225 = vmatpush1.msra.mxu0 0.0
    %226 = vmatprep.subr.mxu0 0.0
    %227 = vmatpush1.msra.mxu0 0.0
    %228 = vmatprep.subr.mxu0 0.0
    %229 = vmatpush1.msra.mxu0 0.0
    %230 = vmatprep.subr.mxu0 0.0
    %231 = vmatpush1.msra.mxu0 0.0
    %232 = vmatprep.subr.mxu0 0.0
    %233 = vmatpush1.msra.mxu0 0.0
    %234 = vmatprep.subr.mxu0 0.0
    %235 = vmatpush1.msra.mxu0 0.0
    %236 = vmatprep.mubr.f32.mxu0 0.0
    %237 = vmatmul.mubr.f32.gmra.mrb[0].mxu0 %v167
    %v238 = vpop.f32.mrb[0].mxu0
    %v239 = vadd.f32 %v163, %v238
    %v240 = vpop.f32.mrb[0].mxu0
    %241 = vmatprep.mubr.f32.mxu0 0.0
    %242 = vmatmul.mubr.f32.gmra.mrb[0].mxu0 %v170
    %v243 = vpop.f32.mrb[0].mxu0
    %v244 = vadd.f32 %v163, %v243
    %v245 = vpop.f32.mrb[0].mxu0
    %246 = vdwg.mxu0
    %v247 = vmax.f32 %v239, 0.0
    %v248 = vmax.f32 %v244, 0.0
    %v249 = vld [vmem:[#allocation5] sm:$0xff]
    %v250 = vld [vmem:[#allocation5 + $0x8] sm:$0xff]
    %v251 = vld [vmem:[#allocation5 + $0x10] sm:$0xff]
    %v252 = vld [vmem:[#allocation5 + $0x18] sm:$0xff]
    %v253 = vld [vmem:[#allocation5 + $0x20] sm:$0xff]
    %v254 = vld [vmem:[#allocation5 + $0x28] sm:$0xff]
    %v255 = vld [vmem:[#allocation5 + $0x30] sm:$0xff]
    %v256 = vld [vmem:[#allocation5 + $0x38] sm:$0xff]
    %v257 = vld [vmem:[#allocation5 + $0x40] sm:$0xff]
    %v258 = vld [vmem:[#allocation5 + $0x48] sm:$0xff]
    %v259 = vld [vmem:[#allocation5 + $0x50] sm:$0xff]
    %v260 = vld [vmem:[#allocation5 + $0x58] sm:$0xff]
    %v261 = vld [vmem:[#allocation5 + $0x60] sm:$0xff]
    %v262 = vld [vmem:[#allocation5 + $0x68] sm:$0xff]
    %v263 = vld [vmem:[#allocation5 + $0x70] sm:$0xff]
    %v264 = vld [vmem:[#allocation5 + $0x78] sm:$0xff]
    %v265 = vld [vmem:[%s5] sm:$0x1]
    %v267 = vlaneseq
    %v268 = vshrl.u32 %v267, 7
    %v269 = vsub.s32 0, %v268
    %v270 = vrot.slane %v265, %v269
    %272 = vmatprep.subr.mxu0 0.0
    %273 = vmatpush1.msra.mxu0 %v249
    %274 = vmatprep.subr.mxu0 0.0
    %275 = vmatpush1.msra.mxu0 %v250
    %276 = vmatprep.subr.mxu0 0.0
    %277 = vmatpush1.msra.mxu0 %v251
    %278 = vmatprep.subr.mxu0 0.0
    %279 = vmatpush1.msra.mxu0 %v252
    %280 = vmatprep.subr.mxu0 0.0
    %281 = vmatpush1.msra.mxu0 %v253
    %282 = vmatprep.subr.mxu0 0.0
    %283 = vmatpush1.msra.mxu0 %v254
    %284 = vmatprep.subr.mxu0 0.0
    %285 = vmatpush1.msra.mxu0 %v255
    %286 = vmatprep.subr.mxu0 0.0
    %287 = vmatpush1.msra.mxu0 %v256
    %288 = vmatprep.subr.mxu0 0.0
    %289 = vmatpush1.msra.mxu0 %v257
    %290 = vmatprep.subr.mxu0 0.0
    %291 = vmatpush1.msra.mxu0 %v258
    %292 = vmatprep.subr.mxu0 0.0
    %293 = vmatpush1.msra.mxu0 %v259
    %294 = vmatprep.subr.mxu0 0.0
    %295 = vmatpush1.msra.mxu0 %v260
    %296 = vmatprep.subr.mxu0 0.0
    %297 = vmatpush1.msra.mxu0 %v261
    %298 = vmatprep.subr.mxu0 0.0
    %299 = vmatpush1.msra.mxu0 %v262
    %300 = vmatprep.subr.mxu0 0.0
    %301 = vmatpush1.msra.mxu0 %v263
    %302 = vmatprep.subr.mxu0 0.0
    %303 = vmatpush1.msra.mxu0 %v264
    %304 = vmatprep.subr.mxu0 0.0
    %305 = vmatpush1.msra.mxu0 0.0
    %306 = vmatprep.subr.mxu0 0.0
    %307 = vmatpush1.msra.mxu0 0.0
    %308 = vmatprep.subr.mxu0 0.0
    %309 = vmatpush1.msra.mxu0 0.0
    %310 = vmatprep.subr.mxu0 0.0
    %311 = vmatpush1.msra.mxu0 0.0
    %312 = vmatprep.subr.mxu0 0.0
    %313 = vmatpush1.msra.mxu0 0.0
    %314 = vmatprep.subr.mxu0 0.0
    %315 = vmatpush1.msra.mxu0 0.0
    %316 = vmatprep.subr.mxu0 0.0
    %317 = vmatpush1.msra.mxu0 0.0
    %318 = vmatprep.subr.mxu0 0.0
    %319 = vmatpush1.msra.mxu0 0.0
    %320 = vmatprep.subr.mxu0 0.0
    %321 = vmatpush1.msra.mxu0 0.0
    %322 = vmatprep.subr.mxu0 0.0
    %323 = vmatpush1.msra.mxu0 0.0
    %324 = vmatprep.subr.mxu0 0.0
    %325 = vmatpush1.msra.mxu0 0.0
    %326 = vmatprep.subr.mxu0 0.0
    %327 = vmatpush1.msra.mxu0 0.0
    %328 = vmatprep.subr.mxu0 0.0
    %329 = vmatpush1.msra.mxu0 0.0
    %330 = vmatprep.subr.mxu0 0.0
    %331 = vmatpush1.msra.mxu0 0.0
    %332 = vmatprep.subr.mxu0 0.0
    %333 = vmatpush1.msra.mxu0 0.0
    %334 = vmatprep.subr.mxu0 0.0
    %335 = vmatpush1.msra.mxu0 0.0
    %336 = vmatprep.mubr.f32.mxu0 0.0
    %337 = vmatmul.mubr.f32.gmra.mrb[0].mxu0 %v247
    %v338 = vpop.f32.mrb[0].mxu0
    %v339 = vadd.f32 %v270, %v338
    %v340 = vpop.f32.mrb[0].mxu0
    %341 = vmatprep.mubr.f32.mxu0 0.0
    %342 = vmatmul.mubr.f32.gmra.mrb[0].mxu0 %v248
    %v343 = vpop.f32.mrb[0].mxu0
    %v344 = vadd.f32 %v270, %v343
    %v345 = vpop.f32.mrb[0].mxu0
    %346 = vdwg.mxu0
    %v347 = vmax.f32 %v339, 0.0
    %v348 = vmax.f32 %v344, 0.0
    %v349 = vld [vmem:[#allocation7] sm:$0xff]
    %v350 = vld [vmem:[#allocation7 + $0x8] sm:$0xff]
    %v351 = vld [vmem:[#allocation7 + $0x10] sm:$0xff]
    %v352 = vld [vmem:[#allocation7 + $0x18] sm:$0xff]
    %v353 = vld [vmem:[#allocation7 + $0x20] sm:$0xff]
    %v354 = vld [vmem:[#allocation7 + $0x28] sm:$0xff]
    %v355 = vld [vmem:[#allocation7 + $0x30] sm:$0xff]
    %v356 = vld [vmem:[#allocation7 + $0x38] sm:$0xff]
    %v357 = vld [vmem:[#allocation7 + $0x40] sm:$0xff]
    %v358 = vld [vmem:[#allocation7 + $0x48] sm:$0xff]
    %v359 = vld [vmem:[#allocation7 + $0x50] sm:$0xff]
    %v360 = vld [vmem:[#allocation7 + $0x58] sm:$0xff]
    %v361 = vld [vmem:[#allocation7 + $0x60] sm:$0xff]
    %v362 = vld [vmem:[#allocation7 + $0x68] sm:$0xff]
    %v363 = vld [vmem:[#allocation7 + $0x70] sm:$0xff]
    %v364 = vld [vmem:[#allocation7 + $0x78] sm:$0xff]
    %v365 = vld [vmem:[%s7] sm:$0x1]
    %v367 = vlaneseq
    %v368 = vshrl.u32 %v367, 7
    %v369 = vsub.s32 0, %v368
    %v370 = vrot.slane %v365, %v369
    %372 = vmatprep.subr.mxu0 0.0
    %373 = vmatpush1.msra.mxu0 %v349
    %374 = vmatprep.subr.mxu0 0.0
    %375 = vmatpush1.msra.mxu0 %v350
    %376 = vmatprep.subr.mxu0 0.0
    %377 = vmatpush1.msra.mxu0 %v351
    %378 = vmatprep.subr.mxu0 0.0
    %379 = vmatpush1.msra.mxu0 %v352
    %380 = vmatprep.subr.mxu0 0.0
    %381 = vmatpush1.msra.mxu0 %v353
    %382 = vmatprep.subr.mxu0 0.0
    %383 = vmatpush1.msra.mxu0 %v354
    %384 = vmatprep.subr.mxu0 0.0
    %385 = vmatpush1.msra.mxu0 %v355
    %386 = vmatprep.subr.mxu0 0.0
    %387 = vmatpush1.msra.mxu0 %v356
    %388 = vmatprep.subr.mxu0 0.0
    %389 = vmatpush1.msra.mxu0 %v357
    %390 = vmatprep.subr.mxu0 0.0
    %391 = vmatpush1.msra.mxu0 %v358
    %392 = vmatprep.subr.mxu0 0.0
    %393 = vmatpush1.msra.mxu0 %v359
    %394 = vmatprep.subr.mxu0 0.0
    %395 = vmatpush1.msra.mxu0 %v360
    %396 = vmatprep.subr.mxu0 0.0
    %397 = vmatpush1.msra.mxu0 %v361
    %398 = vmatprep.subr.mxu0 0.0
    %399 = vmatpush1.msra.mxu0 %v362
    %400 = vmatprep.subr.mxu0 0.0
    %401 = vmatpush1.msra.mxu0 %v363
    %402 = vmatprep.subr.mxu0 0.0
    %403 = vmatpush1.msra.mxu0 %v364
    %404 = vmatprep.subr.mxu0 0.0
    %405 = vmatpush1.msra.mxu0 0.0
    %406 = vmatprep.subr.mxu0 0.0
    %407 = vmatpush1.msra.mxu0 0.0
    %408 = vmatprep.subr.mxu0 0.0
    %409 = vmatpush1.msra.mxu0 0.0
    %410 = vmatprep.subr.mxu0 0.0
    %411 = vmatpush1.msra.mxu0 0.0
    %412 = vmatprep.subr.mxu0 0.0
    %413 = vmatpush1.msra.mxu0 0.0
    %414 = vmatprep.subr.mxu0 0.0
    %415 = vmatpush1.msra.mxu0 0.0
    %416 = vmatprep.subr.mxu0 0.0
    %417 = vmatpush1.msra.mxu0 0.0
    %418 = vmatprep.subr.mxu0 0.0
    %419 = vmatpush1.msra.mxu0 0.0
    %420 = vmatprep.subr.mxu0 0.0
    %421 = vmatpush1.msra.mxu0 0.0
    %422 = vmatprep.subr.mxu0 0.0
    %423 = vmatpush1.msra.mxu0 0.0
    %424 = vmatprep.subr.mxu0 0.0
    %425 = vmatpush1.msra.mxu0 0.0
    %426 = vmatprep.subr.mxu0 0.0
    %427 = vmatpush1.msra.mxu0 0.0
    %428 = vmatprep.subr.mxu0 0.0
    %429 = vmatpush1.msra.mxu0 0.0
    %430 = vmatprep.subr.mxu0 0.0
    %431 = vmatpush1.msra.mxu0 0.0
    %432 = vmatprep.subr.mxu0 0.0
    %433 = vmatpush1.msra.mxu0 0.0
    %434 = vmatprep.subr.mxu0 0.0
    %435 = vmatpush1.msra.mxu0 0.0
    %436 = vmatprep.mubr.f32.mxu0 0.0
    %437 = vmatmul.mubr.f32.gmra.mrb[0].mxu0 %v347
    %v438 = vpop.f32.mrb[0].mxu0
    %v439 = vadd.f32 %v370, %v438
    %v440 = vpop.f32.mrb[0].mxu0
    %441 = vmatprep.mubr.f32.mxu0 0.0
    %442 = vmatmul.mubr.f32.gmra.mrb[0].mxu0 %v348
    %v443 = vpop.f32.mrb[0].mxu0
    %v444 = vadd.f32 %v370, %v443
    %v445 = vpop.f32.mrb[0].mxu0
    %446 = vdwg.mxu0
    %v447 = vld [vmem:[%s8] sm:$0xff]
    %v448 = vld [vmem:[#allocation8] sm:$0xff]
    %v449 = vld [vmem:[#allocation8 + $0x8] sm:$0xff]
    %v450 = vld [vmem:[#allocation8 + $0x10] sm:$0xff]
    %v451 = vld [vmem:[#allocation8 + $0x18] sm:$0xff]
    %v452 = vld [vmem:[#allocation8 + $0x20] sm:$0xff]
    %v453 = vld [vmem:[#allocation8 + $0x28] sm:$0xff]
    %v454 = vld [vmem:[#allocation8 + $0x30] sm:$0xff]
    %v455 = vld [vmem:[#allocation8 + $0x38] sm:$0xff]
    %v456 = vld [vmem:[#allocation8 + $0x40] sm:$0xff]
    %v457 = vld [vmem:[#allocation8 + $0x48] sm:$0xff]
    %v458 = vld [vmem:[#allocation8 + $0x50] sm:$0xff]
    %v459 = vld [vmem:[#allocation8 + $0x58] sm:$0xff]
    %v460 = vld [vmem:[#allocation8 + $0x60] sm:$0xff]
    %v461 = vld [vmem:[#allocation8 + $0x68] sm:$0xff]
    %v462 = vld [vmem:[#allocation8 + $0x70] sm:$0xff]
    %v463 = vld [vmem:[#allocation8 + $0x78] sm:$0xff]
    %464 = vmatprep.subr.mxu0 0.0
    %465 = vmatpush1.msra.mxu0 %v448
    %466 = vmatprep.subr.mxu0 0.0
    %467 = vmatpush1.msra.mxu0 %v449
    %468 = vmatprep.subr.mxu0 0.0
    %469 = vmatpush1.msra.mxu0 %v450
    %470 = vmatprep.subr.mxu0 0.0
    %471 = vmatpush1.msra.mxu0 %v451
    %472 = vmatprep.subr.mxu0 0.0
    %473 = vmatpush1.msra.mxu0 %v452
    %474 = vmatprep.subr.mxu0 0.0
    %475 = vmatpush1.msra.mxu0 %v453
    %476 = vmatprep.subr.mxu0 0.0
    %477 = vmatpush1.msra.mxu0 %v454
    %478 = vmatprep.subr.mxu0 0.0
    %479 = vmatpush1.msra.mxu0 %v455
    %480 = vmatprep.subr.mxu0 0.0
    %481 = vmatpush1.msra.mxu0 %v456
    %482 = vmatprep.subr.mxu0 0.0
    %483 = vmatpush1.msra.mxu0 %v457
    %484 = vmatprep.subr.mxu0 0.0
    %485 = vmatpush1.msra.mxu0 %v458
    %486 = vmatprep.subr.mxu0 0.0
    %487 = vmatpush1.msra.mxu0 %v459
    %488 = vmatprep.subr.mxu0 0.0
    %489 = vmatpush1.msra.mxu0 %v460
    %490 = vmatprep.subr.mxu0 0.0
    %491 = vmatpush1.msra.mxu0 %v461
    %492 = vmatprep.subr.mxu0 0.0
    %493 = vmatpush1.msra.mxu0 %v462
    %494 = vmatprep.subr.mxu0 0.0
    %495 = vmatpush1.msra.mxu0 %v463
    %496 = vmatprep.subr.mxu0 0.0
    %497 = vmatpush1.msra.mxu0 0.0
    %498 = vmatprep.subr.mxu0 0.0
    %499 = vmatpush1.msra.mxu0 0.0
    %500 = vmatprep.subr.mxu0 0.0
    %501 = vmatpush1.msra.mxu0 0.0
    %502 = vmatprep.subr.mxu0 0.0
    %503 = vmatpush1.msra.mxu0 0.0
    %504 = vmatprep.subr.mxu0 0.0
    %505 = vmatpush1.msra.mxu0 0.0
    %506 = vmatprep.subr.mxu0 0.0
    %507 = vmatpush1.msra.mxu0 0.0
    %508 = vmatprep.subr.mxu0 0.0
    %509 = vmatpush1.msra.mxu0 0.0
    %510 = vmatprep.subr.mxu0 0.0
    %511 = vmatpush1.msra.mxu0 0.0
    %512 = vmatprep.subr.mxu0 0.0
    %513 = vmatpush1.msra.mxu0 0.0
    %514 = vmatprep.subr.mxu0 0.0
    %515 = vmatpush1.msra.mxu0 0.0
    %516 = vmatprep.subr.mxu0 0.0
    %517 = vmatpush1.msra.mxu0 0.0
    %518 = vmatprep.subr.mxu0 0.0
    %519 = vmatpush1.msra.mxu0 0.0
    %520 = vmatprep.subr.mxu0 0.0
    %521 = vmatpush1.msra.mxu0 0.0
    %522 = vmatprep.subr.mxu0 0.0
    %523 = vmatpush1.msra.mxu0 0.0
    %524 = vmatprep.subr.mxu0 0.0
    %525 = vmatpush1.msra.mxu0 0.0
    %526 = vmatprep.subr.mxu0 0.0
    %527 = vmatpush1.msra.mxu0 0.0
    %528 = vmatprep.mubr.f32.mxu0 0.0
    %529 = vmatmul.mubr.f32.gmra.mrb[0].mxu0 %v439
    %v530 = vpop.f32.mrb[0].mxu0
    %v531 = vadd.f32 0.0, %v530
    %v532 = vpop.f32.mrb[0].mxu0
    %533 = vmatprep.mubr.f32.mxu0 0.0
    %534 = vmatmul.mubr.f32.gmra.mrb[0].mxu0 %v444
    %v535 = vpop.f32.mrb[0].mxu0
    %v536 = vadd.f32 0.0, %v535
    %v537 = vpop.f32.mrb[0].mxu0
    %538 = vdwg.mxu0
    %vm539 = vcmask 64512
    %v541 = vsel %vm539, %v152, 0
    %v544 = vsel %vm539, %v153, 0
    %546 = vmatprep.subr.mxu0 0.0
    %547 = vmatpush1.msra.mxu0 %v447
    %548 = vmatprep.subr.mxu0 0.0
    %549 = vmatpush1.msra.mxu0 0.0
    %550 = vmatprep.subr.mxu0 0.0
    %551 = vmatpush1.msra.mxu0 0.0
    %552 = vmatprep.subr.mxu0 0.0
    %553 = vmatpush1.msra.mxu0 0.0
    %554 = vmatprep.subr.mxu0 0.0
    %555 = vmatpush1.msra.mxu0 0.0
    %556 = vmatprep.subr.mxu0 0.0
    %557 = vmatpush1.msra.mxu0 0.0
    %558 = vmatprep.subr.mxu0 0.0
    %559 = vmatpush1.msra.mxu0 0.0
    %560 = vmatprep.subr.mxu0 0.0
    %561 = vmatpush1.msra.mxu0 0.0
    %562 = vmatprep.subr.mxu0 0.0
    %563 = vmatpush1.msra.mxu0 0.0
    %564 = vmatprep.subr.mxu0 0.0
    %565 = vmatpush1.msra.mxu0 0.0
    %566 = vmatprep.subr.mxu0 0.0
    %567 = vmatpush1.msra.mxu0 0.0
    %568 = vmatprep.subr.mxu0 0.0
    %569 = vmatpush1.msra.mxu0 0.0
    %570 = vmatprep.subr.mxu0 0.0
    %571 = vmatpush1.msra.mxu0 0.0
    %572 = vmatprep.subr.mxu0 0.0
    %573 = vmatpush1.msra.mxu0 0.0
    %574 = vmatprep.subr.mxu0 0.0
    %575 = vmatpush1.msra.mxu0 0.0
    %576 = vmatprep.subr.mxu0 0.0
    %577 = vmatpush1.msra.mxu0 0.0
    %578 = vmatprep.subr.mxu0 0.0
    %579 = vmatpush1.msra.mxu0 0.0
    %580 = vmatprep.subr.mxu0 0.0
    %581 = vmatpush1.msra.mxu0 0.0
    %582 = vmatprep.subr.mxu0 0.0
    %583 = vmatpush1.msra.mxu0 0.0
    %584 = vmatprep.subr.mxu0 0.0
    %585 = vmatpush1.msra.mxu0 0.0
    %586 = vmatprep.subr.mxu0 0.0
    %587 = vmatpush1.msra.mxu0 0.0
    %588 = vmatprep.subr.mxu0 0.0
    %589 = vmatpush1.msra.mxu0 0.0
    %590 = vmatprep.subr.mxu0 0.0
    %591 = vmatpush1.msra.mxu0 0.0
    %592 = vmatprep.subr.mxu0 0.0
    %593 = vmatpush1.msra.mxu0 0.0
    %594 = vmatprep.subr.mxu0 0.0
    %595 = vmatpush1.msra.mxu0 0.0
    %596 = vmatprep.subr.mxu0 0.0
    %597 = vmatpush1.msra.mxu0 0.0
    %598 = vmatprep.subr.mxu0 0.0
    %599 = vmatpush1.msra.mxu0 0.0
    %600 = vmatprep.subr.mxu0 0.0
    %601 = vmatpush1.msra.mxu0 0.0
    %602 = vmatprep.subr.mxu0 0.0
    %603 = vmatpush1.msra.mxu0 0.0
    %604 = vmatprep.subr.mxu0 0.0
    %605 = vmatpush1.msra.mxu0 0.0
    %606 = vmatprep.subr.mxu0 0.0
    %607 = vmatpush1.msra.mxu0 0.0
    %608 = vmatprep.subr.mxu0 0.0
    %609 = vmatpush1.msra.mxu0 0.0
    %610 = vmatprep.mubr.f32.mxu0 0.0
    %611 = vmatmul.mubr.f32.gmra.mrb[0].mxu0 %v541
    %v612 = vpop.f32.mrb[0].mxu0
    %v613 = vadd.f32 %v531, %v612
    %v614 = vpop.f32.mrb[0].mxu0
    %615 = vmatprep.mubr.f32.mxu0 0.0
    %616 = vmatmul.mubr.f32.gmra.mrb[0].mxu0 %v544
    %v617 = vpop.f32.mrb[0].mxu0
    %v618 = vadd.f32 %v536, %v617
    %v619 = vpop.f32.mrb[0].mxu0
    %620 = vdwg.mxu0
    %v621 = vld [vmem:[%s10] sm:$0x1]
    %v623 = vlaneseq
    %v624 = vshrl.u32 %v623, 7
    %v625 = vsub.s32 0, %v624
    %v626 = vrot.slane %v621, %v625
    %v628 = vadd.f32 %v613, %v626
    %v629 = vadd.f32 %v618, %v626
    %v630 = vmax.f32 %v628, 0.0
    %v631 = vmax.f32 %v629, 0.0
    %v632 = vld [vmem:[#allocation10] sm:$0xff]
    %v633 = vld [vmem:[#allocation10 + $0x8] sm:$0xff]
    %v634 = vld [vmem:[#allocation10 + $0x10] sm:$0xff]
    %v635 = vld [vmem:[#allocation10 + $0x18] sm:$0xff]
    %v636 = vld [vmem:[#allocation10 + $0x20] sm:$0xff]
    %v637 = vld [vmem:[#allocation10 + $0x28] sm:$0xff]
    %v638 = vld [vmem:[#allocation10 + $0x30] sm:$0xff]
    %v639 = vld [vmem:[#allocation10 + $0x38] sm:$0xff]
    %v640 = vld [vmem:[#allocation10 + $0x40] sm:$0xff]
    %v641 = vld [vmem:[#allocation10 + $0x48] sm:$0xff]
    %v642 = vld [vmem:[#allocation10 + $0x50] sm:$0xff]
    %v643 = vld [vmem:[#allocation10 + $0x58] sm:$0xff]
    %v644 = vld [vmem:[#allocation10 + $0x60] sm:$0xff]
    %v645 = vld [vmem:[#allocation10 + $0x68] sm:$0xff]
    %v646 = vld [vmem:[#allocation10 + $0x70] sm:$0xff]
    %v647 = vld [vmem:[#allocation10 + $0x78] sm:$0xff]
    %v648 = vld [vmem:[%s12] sm:$0x1]
    %v650 = vlaneseq
    %v651 = vshrl.u32 %v650, 7
    %v652 = vsub.s32 0, %v651
    %v653 = vrot.slane %v648, %v652
    %655 = vmatprep.subr.mxu0 0.0
    %656 = vmatpush1.msra.mxu0 %v632
    %657 = vmatprep.subr.mxu0 0.0
    %658 = vmatpush1.msra.mxu0 %v633
    %659 = vmatprep.subr.mxu0 0.0
    %660 = vmatpush1.msra.mxu0 %v634
    %661 = vmatprep.subr.mxu0 0.0
    %662 = vmatpush1.msra.mxu0 %v635
    %663 = vmatprep.subr.mxu0 0.0
    %664 = vmatpush1.msra.mxu0 %v636
    %665 = vmatprep.subr.mxu0 0.0
    %666 = vmatpush1.msra.mxu0 %v637
    %667 = vmatprep.subr.mxu0 0.0
    %668 = vmatpush1.msra.mxu0 %v638
    %669 = vmatprep.subr.mxu0 0.0
    %670 = vmatpush1.msra.mxu0 %v639
    %671 = vmatprep.subr.mxu0 0.0
    %672 = vmatpush1.msra.mxu0 %v640
    %673 = vmatprep.subr.mxu0 0.0
    %674 = vmatpush1.msra.mxu0 %v641
    %675 = vmatprep.subr.mxu0 0.0
    %676 = vmatpush1.msra.mxu0 %v642
    %677 = vmatprep.subr.mxu0 0.0
    %678 = vmatpush1.msra.mxu0 %v643
    %679 = vmatprep.subr.mxu0 0.0
    %680 = vmatpush1.msra.mxu0 %v644
    %681 = vmatprep.subr.mxu0 0.0
    %682 = vmatpush1.msra.mxu0 %v645
    %683 = vmatprep.subr.mxu0 0.0
    %684 = vmatpush1.msra.mxu0 %v646
    %685 = vmatprep.subr.mxu0 0.0
    %686 = vmatpush1.msra.mxu0 %v647
    %687 = vmatprep.subr.mxu0 0.0
    %688 = vmatpush1.msra.mxu0 0.0
    %689 = vmatprep.subr.mxu0 0.0
    %690 = vmatpush1.msra.mxu0 0.0
    %691 = vmatprep.subr.mxu0 0.0
    %692 = vmatpush1.msra.mxu0 0.0
    %693 = vmatprep.subr.mxu0 0.0
    %694 = vmatpush1.msra.mxu0 0.0
    %695 = vmatprep.subr.mxu0 0.0
    %696 = vmatpush1.msra.mxu0 0.0
    %697 = vmatprep.subr.mxu0 0.0
    %698 = vmatpush1.msra.mxu0 0.0
    %699 = vmatprep.subr.mxu0 0.0
    %700 = vmatpush1.msra.mxu0 0.0
    %701 = vmatprep.subr.mxu0 0.0
    %702 = vmatpush1.msra.mxu0 0.0
    %703 = vmatprep.subr.mxu0 0.0
    %704 = vmatpush1.msra.mxu0 0.0
    %705 = vmatprep.subr.mxu0 0.0
    %706 = vmatpush1.msra.mxu0 0.0
    %707 = vmatprep.subr.mxu0 0.0
    %708 = vmatpush1.msra.mxu0 0.0
    %709 = vmatprep.subr.mxu0 0.0
    %710 = vmatpush1.msra.mxu0 0.0
    %711 = vmatprep.subr.mxu0 0.0
    %712 = vmatpush1.msra.mxu0 0.0
    %713 = vmatprep.subr.mxu0 0.0
    %714 = vmatpush1.msra.mxu0 0.0
    %715 = vmatprep.subr.mxu0 0.0
    %716 = vmatpush1.msra.mxu0 0.0
    %717 = vmatprep.subr.mxu0 0.0
    %718 = vmatpush1.msra.mxu0 0.0
    %719 = vmatprep.mubr.f32.mxu0 0.0
    %720 = vmatmul.mubr.f32.gmra.mrb[0].mxu0 %v630
    %v721 = vpop.f32.mrb[0].mxu0
    %v722 = vadd.f32 %v653, %v721
    %v723 = vpop.f32.mrb[0].mxu0
    %724 = vmatprep.mubr.f32.mxu0 0.0
    %725 = vmatmul.mubr.f32.gmra.mrb[0].mxu0 %v631
    %v726 = vpop.f32.mrb[0].mxu0
    %v727 = vadd.f32 %v653, %v726
    %v728 = vpop.f32.mrb[0].mxu0
    %729 = vdwg.mxu0
    %v730 = vmax.f32 %v722, 0.0
    %v731 = vmax.f32 %v727, 0.0
    %v732 = vld [vmem:[#allocation11] sm:$0xff]
    %v733 = vld [vmem:[#allocation11 + $0x8] sm:$0xff]
    %v734 = vld [vmem:[#allocation11 + $0x10] sm:$0xff]
    %v735 = vld [vmem:[#allocation11 + $0x18] sm:$0xff]
    %v736 = vld [vmem:[#allocation11 + $0x20] sm:$0xff]
    %v737 = vld [vmem:[#allocation11 + $0x28] sm:$0xff]
    %v738 = vld [vmem:[#allocation11 + $0x30] sm:$0xff]
    %v739 = vld [vmem:[#allocation11 + $0x38] sm:$0xff]
    %v740 = vld [vmem:[#allocation11 + $0x40] sm:$0xff]
    %v741 = vld [vmem:[#allocation11 + $0x48] sm:$0xff]
    %v742 = vld [vmem:[#allocation11 + $0x50] sm:$0xff]
    %v743 = vld [vmem:[#allocation11 + $0x58] sm:$0xff]
    %v744 = vld [vmem:[#allocation11 + $0x60] sm:$0xff]
    %v745 = vld [vmem:[#allocation11 + $0x68] sm:$0xff]
    %v746 = vld [vmem:[#allocation11 + $0x70] sm:$0xff]
    %v747 = vld [vmem:[#allocation11 + $0x78] sm:$0xff]
    %v748 = vld [vmem:[%s14] sm:$0x1]
    %v750 = vlaneseq
    %v751 = vshrl.u32 %v750, 7
    %v752 = vsub.s32 0, %v751
    %v753 = vrot.slane %v748, %v752
    %755 = vmatprep.subr.mxu0 0.0
    %756 = vmatpush1.msra.mxu0 %v732
    %757 = vmatprep.subr.mxu0 0.0
    %758 = vmatpush1.msra.mxu0 %v733
    %759 = vmatprep.subr.mxu0 0.0
    %760 = vmatpush1.msra.mxu0 %v734
    %761 = vmatprep.subr.mxu0 0.0
    %762 = vmatpush1.msra.mxu0 %v735
    %763 = vmatprep.subr.mxu0 0.0
    %764 = vmatpush1.msra.mxu0 %v736
    %765 = vmatprep.subr.mxu0 0.0
    %766 = vmatpush1.msra.mxu0 %v737
    %767 = vmatprep.subr.mxu0 0.0
    %768 = vmatpush1.msra.mxu0 %v738
    %769 = vmatprep.subr.mxu0 0.0
    %770 = vmatpush1.msra.mxu0 %v739
    %771 = vmatprep.subr.mxu0 0.0
    %772 = vmatpush1.msra.mxu0 %v740
    %773 = vmatprep.subr.mxu0 0.0
    %774 = vmatpush1.msra.mxu0 %v741
    %775 = vmatprep.subr.mxu0 0.0
    %776 = vmatpush1.msra.mxu0 %v742
    %777 = vmatprep.subr.mxu0 0.0
    %778 = vmatpush1.msra.mxu0 %v743
    %779 = vmatprep.subr.mxu0 0.0
    %780 = vmatpush1.msra.mxu0 %v744
    %781 = vmatprep.subr.mxu0 0.0
    %782 = vmatpush1.msra.mxu0 %v745
    %783 = vmatprep.subr.mxu0 0.0
    %784 = vmatpush1.msra.mxu0 %v746
    %785 = vmatprep.subr.mxu0 0.0
    %786 = vmatpush1.msra.mxu0 %v747
    %787 = vmatprep.subr.mxu0 0.0
    %788 = vmatpush1.msra.mxu0 0.0
    %789 = vmatprep.subr.mxu0 0.0
    %790 = vmatpush1.msra.mxu0 0.0
    %791 = vmatprep.subr.mxu0 0.0
    %792 = vmatpush1.msra.mxu0 0.0
    %793 = vmatprep.subr.mxu0 0.0
    %794 = vmatpush1.msra.mxu0 0.0
    %795 = vmatprep.subr.mxu0 0.0
    %796 = vmatpush1.msra.mxu0 0.0
    %797 = vmatprep.subr.mxu0 0.0
    %798 = vmatpush1.msra.mxu0 0.0
    %799 = vmatprep.subr.mxu0 0.0
    %800 = vmatpush1.msra.mxu0 0.0
    %801 = vmatprep.subr.mxu0 0.0
    %802 = vmatpush1.msra.mxu0 0.0
    %803 = vmatprep.subr.mxu0 0.0
    %804 = vmatpush1.msra.mxu0 0.0
    %805 = vmatprep.subr.mxu0 0.0
    %806 = vmatpush1.msra.mxu0 0.0
    %807 = vmatprep.subr.mxu0 0.0
    %808 = vmatpush1.msra.mxu0 0.0
    %809 = vmatprep.subr.mxu0 0.0
    %810 = vmatpush1.msra.mxu0 0.0
    %811 = vmatprep.subr.mxu0 0.0
    %812 = vmatpush1.msra.mxu0 0.0
    %813 = vmatprep.subr.mxu0 0.0
    %814 = vmatpush1.msra.mxu0 0.0
    %815 = vmatprep.subr.mxu0 0.0
    %816 = vmatpush1.msra.mxu0 0.0
    %817 = vmatprep.subr.mxu0 0.0
    %818 = vmatpush1.msra.mxu0 0.0
    %819 = vmatprep.mubr.f32.mxu0 0.0
    %820 = vmatmul.mubr.f32.gmra.mrb[0].mxu0 %v730
    %v821 = vpop.f32.mrb[0].mxu0
    %v822 = vadd.f32 %v753, %v821
    %v823 = vpop.f32.mrb[0].mxu0
    %824 = vmatprep.mubr.f32.mxu0 0.0
    %825 = vmatmul.mubr.f32.gmra.mrb[0].mxu0 %v731
    %v826 = vpop.f32.mrb[0].mxu0
    %v827 = vadd.f32 %v753, %v826
    %v828 = vpop.f32.mrb[0].mxu0
    %829 = vdwg.mxu0
    %v830 = vmax.f32 %v822, 0.0
    %v831 = vmax.f32 %v827, 0.0
    %v832 = vld [vmem:[#allocation13] sm:$0xff]
    %v833 = vld [vmem:[#allocation13 + $0x8] sm:$0xff]
    %v834 = vld [vmem:[#allocation13 + $0x10] sm:$0xff]
    %v835 = vld [vmem:[#allocation13 + $0x18] sm:$0xff]
    %v836 = vld [vmem:[#allocation13 + $0x20] sm:$0xff]
    %v837 = vld [vmem:[#allocation13 + $0x28] sm:$0xff]
    %v838 = vld [vmem:[#allocation13 + $0x30] sm:$0xff]
    %v839 = vld [vmem:[#allocation13 + $0x38] sm:$0xff]
    %v840 = vld [vmem:[#allocation13 + $0x40] sm:$0xff]
    %v841 = vld [vmem:[#allocation13 + $0x48] sm:$0xff]
    %v842 = vld [vmem:[#allocation13 + $0x50] sm:$0xff]
    %v843 = vld [vmem:[#allocation13 + $0x58] sm:$0xff]
    %v844 = vld [vmem:[#allocation13 + $0x60] sm:$0xff]
    %v845 = vld [vmem:[#allocation13 + $0x68] sm:$0xff]
    %v846 = vld [vmem:[#allocation13 + $0x70] sm:$0xff]
    %v847 = vld [vmem:[#allocation13 + $0x78] sm:$0xff]
    %v848 = vld [vmem:[%s16] sm:$0x1]
    %v850 = vlaneseq
    %v851 = vshrl.u32 %v850, 7
    %v852 = vsub.s32 0, %v851
    %v853 = vrot.slane %v848, %v852
    %855 = vmatprep.subr.mxu0 0.0
    %856 = vmatpush1.msra.mxu0 %v832
    %857 = vmatprep.subr.mxu0 0.0
    %858 = vmatpush1.msra.mxu0 %v833
    %859 = vmatprep.subr.mxu0 0.0
    %860 = vmatpush1.msra.mxu0 %v834
    %861 = vmatprep.subr.mxu0 0.0
    %862 = vmatpush1.msra.mxu0 %v835
    %863 = vmatprep.subr.mxu0 0.0
    %864 = vmatpush1.msra.mxu0 %v836
    %865 = vmatprep.subr.mxu0 0.0
    %866 = vmatpush1.msra.mxu0 %v837
    %867 = vmatprep.subr.mxu0 0.0
    %868 = vmatpush1.msra.mxu0 %v838
    %869 = vmatprep.subr.mxu0 0.0
    %870 = vmatpush1.msra.mxu0 %v839
    %871 = vmatprep.subr.mxu0 0.0
    %872 = vmatpush1.msra.mxu0 %v840
    %873 = vmatprep.subr.mxu0 0.0
    %874 = vmatpush1.msra.mxu0 %v841
    %875 = vmatprep.subr.mxu0 0.0
    %876 = vmatpush1.msra.mxu0 %v842
    %877 = vmatprep.subr.mxu0 0.0
    %878 = vmatpush1.msra.mxu0 %v843
    %879 = vmatprep.subr.mxu0 0.0
    %880 = vmatpush1.msra.mxu0 %v844
    %881 = vmatprep.subr.mxu0 0.0
    %882 = vmatpush1.msra.mxu0 %v845
    %883 = vmatprep.subr.mxu0 0.0
    %884 = vmatpush1.msra.mxu0 %v846
    %885 = vmatprep.subr.mxu0 0.0
    %886 = vmatpush1.msra.mxu0 %v847
    %887 = vmatprep.subr.mxu0 0.0
    %888 = vmatpush1.msra.mxu0 0.0
    %889 = vmatprep.subr.mxu0 0.0
    %890 = vmatpush1.msra.mxu0 0.0
    %891 = vmatprep.subr.mxu0 0.0
    %892 = vmatpush1.msra.mxu0 0.0
    %893 = vmatprep.subr.mxu0 0.0
    %894 = vmatpush1.msra.mxu0 0.0
    %895 = vmatprep.subr.mxu0 0.0
    %896 = vmatpush1.msra.mxu0 0.0
    %897 = vmatprep.subr.mxu0 0.0
    %898 = vmatpush1.msra.mxu0 0.0
    %899 = vmatprep.subr.mxu0 0.0
    %900 = vmatpush1.msra.mxu0 0.0
    %901 = vmatprep.subr.mxu0 0.0
    %902 = vmatpush1.msra.mxu0 0.0
    %903 = vmatprep.subr.mxu0 0.0
    %904 = vmatpush1.msra.mxu0 0.0
    %905 = vmatprep.subr.mxu0 0.0
    %906 = vmatpush1.msra.mxu0 0.0
    %907 = vmatprep.subr.mxu0 0.0
    %908 = vmatpush1.msra.mxu0 0.0
    %909 = vmatprep.subr.mxu0 0.0
    %910 = vmatpush1.msra.mxu0 0.0
    %911 = vmatprep.subr.mxu0 0.0
    %912 = vmatpush1.msra.mxu0 0.0
    %913 = vmatprep.subr.mxu0 0.0
    %914 = vmatpush1.msra.mxu0 0.0
    %915 = vmatprep.subr.mxu0 0.0
    %916 = vmatpush1.msra.mxu0 0.0
    %917 = vmatprep.subr.mxu0 0.0
    %918 = vmatpush1.msra.mxu0 0.0
    %919 = vmatprep.mubr.f32.mxu0 0.0
    %920 = vmatmul.mubr.f32.gmra.mrb[0].mxu0 %v830
    %v921 = vpop.f32.mrb[0].mxu0
    %v922 = vadd.f32 %v853, %v921
    %v923 = vpop.f32.mrb[0].mxu0
    %924 = vmatprep.mubr.f32.mxu0 0.0
    %925 = vmatmul.mubr.f32.gmra.mrb[0].mxu0 %v831
    %v926 = vpop.f32.mrb[0].mxu0
    %v927 = vadd.f32 %v853, %v926
    %v928 = vpop.f32.mrb[0].mxu0
    %929 = vdwg.mxu0
    %930 = vst [vmem:[#allocation14] sm:$0xff] %v922
    %931 = vst [vmem:[#allocation14 + $0x8] sm:$0xff] %v927
    // Predicated region
    $region98: #{tpu_custom_call.1} parent=1 // pred_check
      _
    $region99: #{tpu_custom_call.1} parent=1 // pred_check_branch
      %933 = sbr.rel (0) target = $region101
    $region100: #{tpu_custom_call.1} parent=1 // pred_region
      %s935 = ssub.s32 256, 256
      %936 = vsyncadd [#allocation4], %s935
      %s937 = sshll.u32 [#allocation14], 4
      %s938 = int_to_ptr.vmem [resolvable:$true] %s937
      %943 = dma.vmem_to_hbm [thread:$0]  %s938, 256, %s17, [#allocation4], 128, 128, 8
    $region101: #{tpu_custom_call.1} parent=1 // pred_fallthru
      _
    // Predicated region
    $region102: #{tpu_custom_call.1} parent=1 // pred_check
      _
    $region103: #{tpu_custom_call.1} parent=1 // pred_check_branch
      %945 = sbr.rel (0) target = $region105
    $region104: #{tpu_custom_call.1} parent=1 // pred_region
      %946 = dma.done [#allocation4], 256
    $region105: #{tpu_custom_call.1} parent=1 // pred_fallthru
      _
    %947 = vsyncpa [#allocation3], 1
    %948 = vsyncpa [#allocation6], 1
    %949 = vsyncpa [#allocation9], 1
    %950 = vsyncpa [#allocation12], 1
    %951 = vsyncpa [#allocation4], 1

</llo_original>
